<compile_context>
chip_gen: v5e
topology: v5e:2x2
jax: 0.10.0
libtpu: 0.0.40
codegen_flags: <defaults>
</compile_context>

<pallas_src>
import jax
import jax.numpy as jnp
import numpy as np
from jax.experimental import pallas as pl
from jax.experimental.pallas import tpu as pltpu

K = 3
PAD = 1


def _round_up(x, m):
    return (x + m - 1) // m * m


def _make_kernel(tap_offsets, tblk):
    def kernel(xa_ref, xb_ref, w_ref, b_ref, a_ref, o_ref):
        # xa_ref/xb_ref: (1, Cin, tblk) bf16 -- row-tiles i and i+1 of the flattened,
        #                zero-padded NCHW input plane (tile i+1 provides the halo).
        # w_ref: (Cout, 9*Cin) bf16   b_ref: (Cout, 1) f32   a_ref: (1, 1) f32 (SMEM)
        # o_ref: (1, Cout, tblk)      -- lane dim = flattened spatial (lane-dense)
        win = jnp.concatenate([xa_ref[0], xb_ref[0]], axis=-1)        # (Cin, 2*tblk)
        win = win.astype(jnp.float32)
        # im2col: 9 statically shifted views stacked along the contraction axis.
        rhs = jnp.concatenate(
            [win[:, off:off + tblk] for off in tap_offsets], axis=0
        ).astype(jnp.bfloat16)                                        # (9*Cin, tblk)
        acc = jax.lax.dot_general(                                    # single MXU matmul
            w_ref[...], rhs,
            dimension_numbers=(((1,), (0,)), ((), ())),
            preferred_element_type=jnp.float32)                       # (Cout, tblk) f32
        acc = acc + b_ref[...]                                        # bias (Cout, 1)
        alpha = a_ref[0, 0]
        acc = jnp.where(acc >= 0.0, acc, alpha * acc)                 # PReLU in f32
        o_ref[0] = acc.astype(o_ref.dtype)

    return kernel


def conv_block_forward(x_nchw, weight_oihw, bias, prelu_alpha, *, tile_h=16):
    """PReLU(Conv2d_3x3_s1_p1(x) + b). x is NCHW like the PyTorch module."""
    N, Cin, H, W = x_nchw.shape
    Cout = weight_oihw.shape[0]
    out_dtype = x_nchw.dtype

    TH = tile_h
    Wp = _round_up(W + 2 * PAD, 8)        # padded row stride (>= W + 2)
    tblk = TH * Wp                        # flattened lane block per row tile
    assert TH % 16 == 0 and tblk % 128 == 0, "row tile must give 128-multiple lane blocks"
    H_eff = _round_up(H, TH)
    n_tiles = H_eff // TH
    R = (n_tiles + 1) * TH                # padded row count = n_tiles + 1 flat blocks

    # --- glue (no transposes): cast to bf16, zero-pad, flatten the spatial dims ---
    x_pad = jnp.pad(x_nchw.astype(jnp.bfloat16),
                    ((0, 0), (0, 0), (PAD, R - H - PAD), (PAD, Wp - W - PAD)))
    x_flat = x_pad.reshape(N, Cin, R * Wp)                # contiguous merge -> free

    # OIHW -> (Cout, 9*Cin); row order (kh, kw, cin) matches the im2col rhs order.
    w2 = jnp.transpose(weight_oihw, (0, 2, 3, 1)).reshape(Cout, K * K * Cin)
    w2 = w2.astype(jnp.bfloat16)
    b2 = bias.reshape(Cout, 1).astype(jnp.float32)
    a2 = jnp.asarray(prelu_alpha, jnp.float32).reshape(1, 1)

    tap_offsets = tuple(kh * Wp + kw for kh in range(K) for kw in range(K))
    kernel = _make_kernel(tap_offsets, tblk)

    flops = 2 * N * H_eff * Wp * K * K * Cin * Cout
    bytes_accessed = (2 * x_flat.size * 2 + w2.size * 2 + b2.size * 4
                      + N * Cout * n_tiles * tblk * np.dtype(out_dtype).itemsize)

    out_flat = pl.pallas_call(
        kernel,
        out_shape=jax.ShapeDtypeStruct((N, Cout, n_tiles * tblk), out_dtype),
        grid=(N, n_tiles),
        in_specs=[
            pl.BlockSpec((1, Cin, tblk), lambda n, i: (n, 0, i)),       # row tile i
            pl.BlockSpec((1, Cin, tblk), lambda n, i: (n, 0, i + 1)),   # halo tile i+1
            pl.BlockSpec((Cout, K * K * Cin), lambda n, i: (0, 0)),     # fused weights
            pl.BlockSpec((Cout, 1), lambda n, i: (0, 0)),               # bias
            pl.BlockSpec((1, 1), lambda n, i: (0, 0),
                         memory_space=pltpu.MemorySpace.SMEM),          # PReLU alpha
        ],
        out_specs=pl.BlockSpec((1, Cout, tblk), lambda n, i: (n, 0, i)),
        compiler_params=pltpu.CompilerParams(
            dimension_semantics=("parallel", "parallel"),
            vmem_limit_bytes=32 * 1024 * 1024),
        cost_estimate=pl.CostEstimate(flops=int(flops), transcendentals=0,
                                      bytes_accessed=int(bytes_accessed)),
    )(x_flat, x_flat, w2, b2, a2)

    # Drop the junk right-columns / bottom-rows that only exist to keep the lane
    # blocks 128-dense; the reshape is free and the slice is one output-sized copy.
    out = out_flat.reshape(N, Cout, H_eff, Wp)[:, :, :H, :W]
    return out


def reference_forward(x_nchw, weight_oihw, bias, prelu_alpha):
    out = jax.lax.conv_general_dilated(
        x_nchw, weight_oihw,
        window_strides=(1, 1),
        padding=((PAD, PAD), (PAD, PAD)),
        dimension_numbers=("NCHW", "OIHW", "NCHW"),
        precision=jax.lax.Precision.HIGHEST)
    out = out + bias.reshape(1, -1, 1, 1)
    return jnp.where(out >= 0, out, prelu_alpha * out)


if __name__ == "__main__":
    # Small shapes consistent with the module: batch=2, Cin=4, Cout=8, H=W=16.
    N, Cin, Cout, H, W = 2, 4, 8, 16, 16

    key = jax.random.PRNGKey(0)
    kx, kwt, kb = jax.random.split(key, 3)

    x = jax.random.normal(kx, (N, Cin, H, W), dtype=jnp.float32)
    fan_in = Cin * K * K
    bound = 1.0 / np.sqrt(fan_in)
    weight = jax.random.uniform(kwt, (Cout, Cin, K, K), jnp.float32, -bound, bound)
    bias = jax.random.uniform(kb, (Cout,), jnp.float32, -bound, bound)
    prelu_alpha = jnp.float32(0.25)  # torch.nn.PReLU() default

    fwd = jax.jit(conv_block_forward)
    out = jax.block_until_ready(fwd(x, weight, bias, prelu_alpha))
    assert out.shape == (N, Cout, H, W)

    # Reference using the same bf16 quantization of x/w the kernel's matmul path
    # uses (both accumulate in f32), so the comparison can be tight.
    x_q = x.astype(jnp.bfloat16).astype(jnp.float32)
    w_q = weight.astype(jnp.bfloat16).astype(jnp.float32)
    ref = jax.block_until_ready(reference_forward(x_q, w_q, bias, prelu_alpha))
    np.testing.assert_allclose(np.asarray(out), np.asarray(ref), rtol=2e-3, atol=2e-3)

    print("KERNEL_OK")
</pallas_src>

<mosaic_0001>
module attributes {stable_mosaic.version = 11 : i64} {
  func.func @kernel(%arg0: i32, %arg1: i32, %arg2: memref<1x4x384xbf16, #tpu.memory_space<vmem>>, %arg3: memref<1x4x384xbf16, #tpu.memory_space<vmem>>, %arg4: memref<8x36xbf16, #tpu.memory_space<vmem>>, %arg5: memref<8x1xf32, #tpu.memory_space<vmem>>, %arg6: memref<1x1xf32, #tpu.memory_space<smem>>, %arg7: memref<1x8x384xf32, #tpu.memory_space<vmem>>) attributes {dimension_semantics = [#tpu.dimension_semantics<parallel>, #tpu.dimension_semantics<parallel>], iteration_bounds = array<i64: 2, 1>, scalar_prefetch = 0 : i64, scratch_operands = 0 : i64, tpu.core_type = #tpu.core_type<tc>, window_params = [{transform_indices = @transform_0, window_bounds = array<i64: 1, 4, 384>}, {transform_indices = @transform_1, window_bounds = array<i64: 1, 4, 384>}, {pipeline_mode = #tpu.pipeline_mode<synchronous>, transform_indices = @transform_2, window_bounds = array<i64: 8, 36>}, {pipeline_mode = #tpu.pipeline_mode<synchronous>, transform_indices = @transform_3, window_bounds = array<i64: 8, 1>}, {transform_indices = @transform_4, window_bounds = array<i64: 1, 1>}, {transform_indices = @transform_5, window_bounds = array<i64: 1, 8, 384>}]} {
    %c0 = arith.constant 0 : index
    %c0_0 = arith.constant 0 : index
    %c0_1 = arith.constant 0 : index
    %0 = vector.load %arg2[%c0, %c0_0, %c0_1] : memref<1x4x384xbf16, #tpu.memory_space<vmem>>, vector<1x4x384xbf16>
    %1 = vector.shape_cast %0 : vector<1x4x384xbf16> to vector<4x384xbf16>
    %c0_2 = arith.constant 0 : index
    %c0_3 = arith.constant 0 : index
    %c0_4 = arith.constant 0 : index
    %2 = vector.load %arg3[%c0_2, %c0_3, %c0_4] : memref<1x4x384xbf16, #tpu.memory_space<vmem>>, vector<1x4x384xbf16>
    %3 = vector.shape_cast %2 : vector<1x4x384xbf16> to vector<4x384xbf16>
    %4 = tpu.concatenate %1, %3 in 1 : vector<4x384xbf16>, vector<4x384xbf16> -> vector<4x768xbf16>
    %5 = arith.extf %4 : vector<4x768xbf16> to vector<4x768xf32>
    %6 = vector.extract_strided_slice %5 {offsets = [0, 0], sizes = [4, 384], strides = [1, 1]} : vector<4x768xf32> to vector<4x384xf32>
    %7 = vector.extract_strided_slice %5 {offsets = [0, 1], sizes = [4, 384], strides = [1, 1]} : vector<4x768xf32> to vector<4x384xf32>
    %8 = vector.extract_strided_slice %5 {offsets = [0, 2], sizes = [4, 384], strides = [1, 1]} : vector<4x768xf32> to vector<4x384xf32>
    %9 = vector.extract_strided_slice %5 {offsets = [0, 24], sizes = [4, 384], strides = [1, 1]} : vector<4x768xf32> to vector<4x384xf32>
    %10 = vector.extract_strided_slice %5 {offsets = [0, 25], sizes = [4, 384], strides = [1, 1]} : vector<4x768xf32> to vector<4x384xf32>
    %11 = vector.extract_strided_slice %5 {offsets = [0, 26], sizes = [4, 384], strides = [1, 1]} : vector<4x768xf32> to vector<4x384xf32>
    %12 = vector.extract_strided_slice %5 {offsets = [0, 48], sizes = [4, 384], strides = [1, 1]} : vector<4x768xf32> to vector<4x384xf32>
    %13 = vector.extract_strided_slice %5 {offsets = [0, 49], sizes = [4, 384], strides = [1, 1]} : vector<4x768xf32> to vector<4x384xf32>
    %14 = vector.extract_strided_slice %5 {offsets = [0, 50], sizes = [4, 384], strides = [1, 1]} : vector<4x768xf32> to vector<4x384xf32>
    %15 = tpu.concatenate %6, %7, %8, %9, %10, %11, %12, %13, %14 in 0 : vector<4x384xf32>, vector<4x384xf32>, vector<4x384xf32>, vector<4x384xf32>, vector<4x384xf32>, vector<4x384xf32>, vector<4x384xf32>, vector<4x384xf32>, vector<4x384xf32> -> vector<36x384xf32>
    %16 = arith.truncf %15 : vector<36x384xf32> to vector<36x384xbf16>
    %c0_5 = arith.constant 0 : index
    %c0_6 = arith.constant 0 : index
    %17 = vector.load %arg4[%c0_5, %c0_6] : memref<8x36xbf16, #tpu.memory_space<vmem>>, vector<8x36xbf16>
    %cst = arith.constant dense<0.000000e+00> : vector<8x384xf32>
    %18 = tpu.matmul %17, %16, %cst {dimension_numbers = #tpu.dot_dimension_numbers<[1], [0], [0], [1], [0, 0, 1, 1], [], []>} : vector<8x36xbf16>, vector<36x384xbf16>, vector<8x384xf32> -> vector<8x384xf32>
    %c0_7 = arith.constant 0 : index
    %c0_8 = arith.constant 0 : index
    %19 = vector.load %arg5[%c0_7, %c0_8] : memref<8x1xf32, #tpu.memory_space<vmem>>, vector<8x1xf32>
    %20 = vector.broadcast %19 : vector<8x1xf32> to vector<8x384xf32>
    %21 = arith.addf %18, %20 : vector<8x384xf32>
    %c0_9 = arith.constant 0 : index
    %c0_10 = arith.constant 0 : index
    %22 = memref.load %arg6[%c0_9, %c0_10] : memref<1x1xf32, #tpu.memory_space<smem>>
    %cst_11 = arith.constant 0.000000e+00 : f32
    %23 = vector.broadcast %cst_11 : f32 to vector<8x384xf32>
    %24 = arith.cmpf oge, %21, %23 : vector<8x384xf32>
    %25 = vector.broadcast %22 : f32 to vector<8x384xf32>
    %26 = arith.mulf %25, %21 : vector<8x384xf32>
    %27 = arith.select %24, %21, %26 : vector<8x384xi1>, vector<8x384xf32>
    %c0_12 = arith.constant 0 : index
    %c0_13 = arith.constant 0 : index
    %c0_14 = arith.constant 0 : index
    %28 = vector.load %arg7[%c0_12, %c0_13, %c0_14] : memref<1x8x384xf32, #tpu.memory_space<vmem>>, vector<1x8x384xf32>
    %29 = vector.shape_cast %28 : vector<1x8x384xf32> to vector<8x384xf32>
    %30 = vector.shape_cast %27 : vector<8x384xf32> to vector<1x8x384xf32>
    tpu.vector_store %arg7[%c0_12, %c0_13, %c0_14], %30 {strides = array<i32>} : memref<1x8x384xf32, #tpu.memory_space<vmem>>, vector<1x8x384xf32>,
    return
  }
  func.func @transform_0(%arg0: i32, %arg1: i32) -> (i32, i32, i32) {
    %c0_i32 = arith.constant 0 : i32
    %c0_i32_0 = arith.constant 0 : i32
    return %arg0, %c0_i32, %arg1 : i32, i32, i32
  }
  func.func @transform_1(%arg0: i32, %arg1: i32) -> (i32, i32, i32) {
    %c1_i32 = arith.constant 1 : i32
    %0 = arith.addi %arg1, %c1_i32 : i32
    %c0_i32 = arith.constant 0 : i32
    %c0_i32_0 = arith.constant 0 : i32
    return %arg0, %c0_i32, %0 : i32, i32, i32
  }
  func.func @transform_2(%arg0: i32, %arg1: i32) -> (i32, i32) {
    %c0_i32 = arith.constant 0 : i32
    %c0_i32_0 = arith.constant 0 : i32
    %c0_i32_1 = arith.constant 0 : i32
    return %c0_i32, %c0_i32_0 : i32, i32
  }
  func.func @transform_3(%arg0: i32, %arg1: i32) -> (i32, i32) {
    %c0_i32 = arith.constant 0 : i32
    %c0_i32_0 = arith.constant 0 : i32
    %c0_i32_1 = arith.constant 0 : i32
    return %c0_i32, %c0_i32_0 : i32, i32
  }
  func.func @transform_4(%arg0: i32, %arg1: i32) -> (i32, i32) {
    %c0_i32 = arith.constant 0 : i32
    %c0_i32_0 = arith.constant 0 : i32
    %c0_i32_1 = arith.constant 0 : i32
    return %c0_i32, %c0_i32_0 : i32, i32
  }
  func.func @transform_5(%arg0: i32, %arg1: i32) -> (i32, i32, i32) {
    %c0_i32 = arith.constant 0 : i32
    %c0_i32_0 = arith.constant 0 : i32
    return %arg0, %c0_i32, %arg1 : i32, i32, i32
  }
}

</mosaic_0001>

<llo_original>
// kernel: conv_block_forward.1
$region0: #{conv_block_forward.1}
  #allocation0 [shape = 'u32[]', space=smem, size = 0x4, offset = 0x4, fixed_abs, tag = 'smem constant byte address 0x4 - core index']
  #allocation1 [shape = 'u32[72,128]{1,0:T(1,128)}', space=vmem, size = 0x9000, scoped, tag = 'internal scratch']
  #allocation2 [shape = 'f32[1,1]{1,0:T(1,128)S(6)}', space=smem, size = 0x200, scoped, tag = 'scoped memory for conv_block_forward.1']
  %s0 = inlined_call_operand.vmem [shape: bf16[2,4,768], index: 0, kind: input, shape index: {}, may-alias: {0,1}]
  %s1 = inlined_call_operand.vmem [shape: bf16[2,4,768], index: 1, kind: input, shape index: {}, may-alias: {0,1}]
  %s2 = inlined_call_operand.vmem [shape: bf16[8,36], index: 2, kind: input, shape index: {}]
  %s3 = inlined_call_operand.vmem [shape: f32[8,1], index: 3, kind: input, shape index: {}]
  %s4 = inlined_call_operand.<no memory space> [shape: f32[1,1], index: 4, kind: input, shape index: {}]
  %s5 = inlined_call_operand.vmem [shape: f32[2,8,384], index: 5, kind: output, shape index: {}]
  %s6 = sld [smem:[#allocation0]]
  $region53: #{conv_block_forward.1} parent=0
    _
  %s8 = ssub.s32 1, %s6
  %s9 = scalar_select 0, %s8, %s6
  %10 = sst [smem:[#allocation2]] %s4
  loop: start=0, step=1, limit=4
  $region2: #{conv_block_forward.1} parent=0 // loop_pre_header
    _
  $region3: #{conv_block_forward.1} parent=0 // loop_header
    %s12 = sphi 0, %s16
    %p13 = scmp.ge.s32.totalorder %s12, 4
    %s19 = sphi 0, %s31
    %s20 = sphi 0, %s27
    %s21 = sphi 0, %s19
    %s22 = sphi 0, %s20
    %s23 = sphi 0, %s21
    %s24 = sphi 0, %s22
    %s36 = sphi 0, %s38
    %s39 = sphi 0, %s36
    %s40 = sphi 0, %s39
    %s56 = sphi 0, %s40
    %s66 = sphi 0, %s68
    %s69 = sphi 0, %s66
    %s70 = sphi 0, %s69
    %s86 = sphi 0, %s70
    %s90 = sphi 0, %s90
    %s92 = sphi 0, %s90
    %s93 = sphi 0, %s92
    %s107 = sphi 0, %s93
    %s111 = sphi 0, %s111
    %s113 = sphi 0, %s111
    %s114 = sphi 0, %s113
    %s128 = sphi 0, %s114
    %s132 = sphi 0, %s132
    %s134 = sphi 0, %s132
    %s135 = sphi 0, %s134
    %s149 = sphi 0, %s135
    %s157 = sphi 0, %s159
    %s160 = sphi 0, %s157
    %s161 = sphi 0, %s160
    %s177 = sphi 0, %s161
  $region4: #{conv_block_forward.1} parent=0 // loop_header_branch
    %15 = sbr.rel (%p13) target = $region8
  $region5: #{conv_block_forward.1} parent=0 // loop_body
    %s17 = ssub.s32 %s12, 1
    %s18 = ssub.s32 %s12, 2
    %s25 = sadd.s32 1, %s20
    %p26 = scmp.ge.s32.totalorder %s25, 1
    %s27 = scalar_select %p26, 0, %s25
    %s28 = sadd.s32 1, %s19
    %s29 = scalar_select %p26, %s28, %s19
    %p30 = scmp.ge.s32.totalorder %s29, 2
    %s31 = scalar_select %p30, 0, %s29
    %s32 = ssub.s32 %s19, %s31
    %s33 = ssub.s32 %s20, %s27
    %s34 = sor.u32 %s32, %s33
    %p35 = scmp.eq.s32.totalorder %s34, 0
    %s37 = sadd.s32 %s36, 1
    %s38 = scalar_select %p35, %s36, %s37
    %p41 = pneg %p35
    %p42 = scmp.eq.s32.totalorder %s12, 1
    %p43 = por %p41, %p42
    %p44 = scmp.ne.s32.totalorder %s36, %s39
    %p45 = scmp.eq.s32.totalorder %s12, 0
    %p46 = por %p44, %p45
    %p47 = scmp.ne.s32.totalorder %s36, %s39
    %p48 = scmp.eq.s32.totalorder %s17, 1
    %p49 = por %p47, %p48
    %p50 = scmp.ne.s32.totalorder %s39, %s40
    %p51 = scmp.eq.s32.totalorder %s17, 0
    %p52 = por %p50, %p51
    %p53 = scmp.ne.s32.totalorder %s39, %s40
    %p54 = scmp.eq.s32.totalorder %s18, 1
    %p55 = por %p53, %p54
    %p57 = scmp.ne.s32.totalorder %s40, %s56
    %p58 = scmp.eq.s32.totalorder %s18, 0
    %p59 = por %p57, %p58
    %s60 = sadd.s32 %s20, 1
    %s61 = sadd.s32 %s27, 1
    %s62 = ssub.s32 %s19, %s31
    %s63 = ssub.s32 %s60, %s61
    %s64 = sor.u32 %s62, %s63
    %p65 = scmp.eq.s32.totalorder %s64, 0
    %s67 = sadd.s32 %s66, 1
    %s68 = scalar_select %p65, %s66, %s67
    %p71 = pneg %p65
    %p72 = scmp.eq.s32.totalorder %s12, 1
    %p73 = por %p71, %p72
    %p74 = scmp.ne.s32.totalorder %s66, %s69
    %p75 = scmp.eq.s32.totalorder %s12, 0
    %p76 = por %p74, %p75
    %p77 = scmp.ne.s32.totalorder %s66, %s69
    %p78 = scmp.eq.s32.totalorder %s17, 1
    %p79 = por %p77, %p78
    %p80 = scmp.ne.s32.totalorder %s69, %s70
    %p81 = scmp.eq.s32.totalorder %s17, 0
    %p82 = por %p80, %p81
    %p83 = scmp.ne.s32.totalorder %s69, %s70
    %p84 = scmp.eq.s32.totalorder %s18, 1
    %p85 = por %p83, %p84
    %p87 = scmp.ne.s32.totalorder %s70, %s86
    %p88 = scmp.eq.s32.totalorder %s18, 0
    %p89 = por %p87, %p88
    %s91 = sadd.s32 %s90, 1
    %p94 = scmp.eq.s32.totalorder %s12, 1
    %p95 = scmp.ne.s32.totalorder %s90, %s92
    %p96 = scmp.eq.s32.totalorder %s12, 0
    %p97 = por %p95, %p96
    %p98 = scmp.ne.s32.totalorder %s90, %s92
    %p99 = scmp.eq.s32.totalorder %s17, 1
    %p100 = por %p98, %p99
    %p101 = scmp.ne.s32.totalorder %s92, %s93
    %p102 = scmp.eq.s32.totalorder %s17, 0
    %p103 = por %p101, %p102
    %p104 = scmp.ne.s32.totalorder %s92, %s93
    %p105 = scmp.eq.s32.totalorder %s18, 1
    %p106 = por %p104, %p105
    %p108 = scmp.ne.s32.totalorder %s93, %s107
    %p109 = scmp.eq.s32.totalorder %s18, 0
    %p110 = por %p108, %p109
    %s112 = sadd.s32 %s111, 1
    %p115 = scmp.eq.s32.totalorder %s12, 1
    %p116 = scmp.ne.s32.totalorder %s111, %s113
    %p117 = scmp.eq.s32.totalorder %s12, 0
    %p118 = por %p116, %p117
    %p119 = scmp.ne.s32.totalorder %s111, %s113
    %p120 = scmp.eq.s32.totalorder %s17, 1
    %p121 = por %p119, %p120
    %p122 = scmp.ne.s32.totalorder %s113, %s114
    %p123 = scmp.eq.s32.totalorder %s17, 0
    %p124 = por %p122, %p123
    %p125 = scmp.ne.s32.totalorder %s113, %s114
    %p126 = scmp.eq.s32.totalorder %s18, 1
    %p127 = por %p125, %p126
    %p129 = scmp.ne.s32.totalorder %s114, %s128
    %p130 = scmp.eq.s32.totalorder %s18, 0
    %p131 = por %p129, %p130
    %s133 = sadd.s32 %s132, 1
    %p136 = scmp.eq.s32.totalorder %s12, 1
    %p137 = scmp.ne.s32.totalorder %s132, %s134
    %p138 = scmp.eq.s32.totalorder %s12, 0
    %p139 = por %p137, %p138
    %p140 = scmp.ne.s32.totalorder %s132, %s134
    %p141 = scmp.eq.s32.totalorder %s17, 1
    %p142 = por %p140, %p141
    %p143 = scmp.ne.s32.totalorder %s134, %s135
    %p144 = scmp.eq.s32.totalorder %s17, 0
    %p145 = por %p143, %p144
    %p146 = scmp.ne.s32.totalorder %s134, %s135
    %p147 = scmp.eq.s32.totalorder %s18, 1
    %p148 = por %p146, %p147
    %p150 = scmp.ne.s32.totalorder %s135, %s149
    %p151 = scmp.eq.s32.totalorder %s18, 0
    %p152 = por %p150, %p151
    %s153 = ssub.s32 %s19, %s31
    %s154 = ssub.s32 %s20, %s27
    %s155 = sor.u32 %s153, %s154
    %p156 = scmp.eq.s32.totalorder %s155, 0
    %s158 = sadd.s32 %s157, 1
    %s159 = scalar_select %p156, %s157, %s158
    %p162 = pneg %p156
    %p163 = scmp.eq.s32.totalorder %s12, 1
    %p164 = por %p162, %p163
    %p165 = scmp.ne.s32.totalorder %s157, %s160
    %p166 = scmp.eq.s32.totalorder %s12, 0
    %p167 = por %p165, %p166
    %p168 = scmp.ne.s32.totalorder %s157, %s160
    %p169 = scmp.eq.s32.totalorder %s17, 1
    %p170 = por %p168, %p169
    %p171 = scmp.ne.s32.totalorder %s160, %s161
    %p172 = scmp.eq.s32.totalorder %s17, 0
    %p173 = por %p171, %p172
    %p174 = scmp.ne.s32.totalorder %s160, %s161
    %p175 = scmp.eq.s32.totalorder %s18, 1
    %p176 = por %p174, %p175
    %p178 = scmp.ne.s32.totalorder %s161, %s177
    %p179 = scmp.eq.s32.totalorder %s18, 0
    %p180 = por %p178, %p179
    %p181 = scmp.le.s32.totalorder 1, %s12
    %p182 = scmp.lt.s32.totalorder %s12, 3
    %p183 = pnand %p181, %p182
    %p184 = pneg %p183
    // Predicated region
    $region9: #{conv_block_forward.1} parent=5 // pred_check
      _
    $region10: #{conv_block_forward.1} parent=5 // pred_check_branch
      %186 = sbr.rel (%p183) target = $region12
    $region11: #{conv_block_forward.1} parent=5 // pred_region
      %s187 = ssub.s32 %s12, 1
      // Predicated region
      $region13: #{conv_block_forward.1} parent=11 // pred_check
        %p188 = pneg %p103
      $region14: #{conv_block_forward.1} parent=11 // pred_check_branch
        %190 = sbr.rel (%p188) target = $region16
      $region15: #{conv_block_forward.1} parent=11 // pred_region
        _
      $region16: #{conv_block_forward.1} parent=11 // pred_fallthru
        _
      // Predicated region
      $region17: #{conv_block_forward.1} parent=11 // pred_check
        %p191 = pneg %p124
      $region18: #{conv_block_forward.1} parent=11 // pred_check_branch
        %193 = sbr.rel (%p191) target = $region20
      $region19: #{conv_block_forward.1} parent=11 // pred_region
        _
      $region20: #{conv_block_forward.1} parent=11 // pred_fallthru
        _
      // Predicated region
      $region21: #{conv_block_forward.1} parent=11 // pred_check
        %p194 = pneg %p145
      $region22: #{conv_block_forward.1} parent=11 // pred_check_branch
        %196 = sbr.rel (%p194) target = $region24
      $region23: #{conv_block_forward.1} parent=11 // pred_region
        _
      $region24: #{conv_block_forward.1} parent=11 // pred_fallthru
        _
    $region12: #{conv_block_forward.1} parent=5 // pred_fallthru
      _
    %p197 = scmp.lt.s32.totalorder %s12, 2
    // Predicated region
    $region25: #{conv_block_forward.1} parent=5 // pred_check
      %p198 = pneg %p197
    $region26: #{conv_block_forward.1} parent=5 // pred_check_branch
      %200 = sbr.rel (%p198) target = $region28
    $region27: #{conv_block_forward.1} parent=5 // pred_region
      // Predicated region
      $region29: #{conv_block_forward.1} parent=27 // pred_check
        %p201 = pneg %p46
      $region30: #{conv_block_forward.1} parent=27 // pred_check_branch
        %203 = sbr.rel (%p201) target = $region32
      $region31: #{conv_block_forward.1} parent=27 // pred_region
        %s204 = smul.u32 3, %s20
        %p205 = scmp.lt.s32.totalorder %s19, 1
        %s206 = scalar_select %p205, %s19, 1
        %p207 = scmp.lt.s32.totalorder %s204, 5
        %s208 = scalar_select %p207, %s204, 5
        %s209 = smul.addr %s206, 6
        %s210 = sadd.s32 %s208, %s209
        %s211 = smul.addr %s210, 2
        %s212 = scalar_lea.vmem %s0, %s211
        %s213 = smul.u32 3, %s20
      $region32: #{conv_block_forward.1} parent=27 // pred_fallthru
        _
      // Predicated region
      $region33: #{conv_block_forward.1} parent=27 // pred_check
        %p214 = pneg %p76
      $region34: #{conv_block_forward.1} parent=27 // pred_check_branch
        %216 = sbr.rel (%p214) target = $region36
      $region35: #{conv_block_forward.1} parent=27 // pred_region
        %s217 = sadd.s32 %s20, 1
        %s218 = smul.u32 3, %s217
        %p219 = scmp.lt.s32.totalorder %s19, 1
        %s220 = scalar_select %p219, %s19, 1
        %p221 = scmp.lt.s32.totalorder %s218, 5
        %s222 = scalar_select %p221, %s218, 5
        %s223 = smul.addr %s220, 6
        %s224 = sadd.s32 %s222, %s223
        %s225 = smul.addr %s224, 2
        %s226 = scalar_lea.vmem %s1, %s225
        %s227 = sadd.s32 %s20, 1
        %s228 = smul.u32 3, %s227
      $region36: #{conv_block_forward.1} parent=27 // pred_fallthru
        _
    $region28: #{conv_block_forward.1} parent=5 // pred_fallthru
      _
    %p229 = scmp.le.s32.totalorder 1, %s12
    %p230 = scmp.lt.s32.totalorder %s12, 3
    %p231 = pnand %p229, %p230
    %p232 = pneg %p231
    // Predicated region
    $region37: #{conv_block_forward.1} parent=5 // pred_check
      _
    $region38: #{conv_block_forward.1} parent=5 // pred_check_branch
      %234 = sbr.rel (%p231) target = $region40
    $region39: #{conv_block_forward.1} parent=5 // pred_region
      %s235 = ssub.s32 %s12, 1
      %s236 = smul.u32 3, %s22
      %p237 = scmp.lt.s32.totalorder %s21, 1
      %s238 = scalar_select %p237, %s21, 1
      %p239 = scmp.lt.s32.totalorder %s236, 5
      %s240 = scalar_select %p239, %s236, 5
      %s241 = smul.addr %s238, 6
      %s242 = sadd.s32 %s240, %s241
      %s243 = smul.addr %s242, 2
      %s244 = scalar_lea.vmem %s0, %s243
      %p245 = pneg %p52
      %p246 = pneg %p49
      %s247 = sadd.s32 %s22, 1
      %s248 = smul.u32 3, %s247
      %p249 = scmp.lt.s32.totalorder %s21, 1
      %s250 = scalar_select %p249, %s21, 1
      %p251 = scmp.lt.s32.totalorder %s248, 5
      %s252 = scalar_select %p251, %s248, 5
      %s253 = smul.addr %s250, 6
      %s254 = sadd.s32 %s252, %s253
      %s255 = smul.addr %s254, 2
      %s256 = scalar_lea.vmem %s1, %s255
      %p257 = pneg %p82
      %p258 = pneg %p79
      %p259 = pneg %p103
      %p260 = pneg %p100
      %p261 = pneg %p124
      %p262 = pneg %p121
      %p263 = pneg %p145
      %p264 = pneg %p142
      %p265 = pneg %p173
      %p266 = pneg %p170
      %s267 = smul.u32 3, %s22
      %p268 = scmp.lt.s32.totalorder %s21, 1
      %s269 = scalar_select %p268, %s21, 1
      %p270 = scmp.lt.s32.totalorder %s267, 2
      %s271 = scalar_select %p270, %s267, 2
      %s272 = smul.addr %s269, 3
      %s273 = sadd.s32 %s271, %s272
      %s274 = smul.addr %s273, 8
      %s275 = scalar_lea.vmem %s5, %s274
      %s276 = smul.u32 3, %s22
      %p277 = scmp.lt.s32.totalorder %s21, 1
      %s278 = scalar_select %p277, %s21, 1
      %p279 = scmp.lt.s32.totalorder %s276, 5
      %s280 = scalar_select %p279, %s276, 5
      %s281 = smul.addr %s278, 6
      %s282 = sadd.s32 %s280, %s281
      %s283 = smul.addr %s282, 2
      %s284 = scalar_lea.vmem %s0, %s283
      %s285 = smul.u32 3, %s22
      %s286 = sadd.s32 %s22, 1
      %s287 = smul.u32 3, %s286
      %p288 = scmp.lt.s32.totalorder %s21, 1
      %s289 = scalar_select %p288, %s21, 1
      %p290 = scmp.lt.s32.totalorder %s287, 5
      %s291 = scalar_select %p290, %s287, 5
      %s292 = smul.addr %s289, 6
      %s293 = sadd.s32 %s291, %s292
      %s294 = smul.addr %s293, 2
      %s295 = scalar_lea.vmem %s1, %s294
      %s296 = sadd.s32 %s22, 1
      %s297 = smul.u32 3, %s296
      %s298 = smul.u32 3, %s22
      %p299 = scmp.lt.s32.totalorder %s21, 1
      %s300 = scalar_select %p299, %s21, 1
      %p301 = scmp.lt.s32.totalorder %s298, 2
      %s302 = scalar_select %p301, %s298, 2
      %s303 = smul.addr %s300, 3
      %s304 = sadd.s32 %s302, %s303
      %s305 = smul.addr %s304, 8
      %s306 = scalar_lea.vmem %s5, %s305
      %s307 = smul.u32 3, %s22
      %v309 = vld [vmem:[%s284] sm:$0x3f]
      %v310 = vld [vmem:[%s295] sm:$0x3f]
      %312 = vst [vmem:[#allocation1] ss:$4 sm:$0xff] %v309
      %v313 = vld.sshfl [vmem:[#allocation1] sm:$0xff pattern:$0x73625140]
      %v314 = vld.sshfl [vmem:[#allocation1 + $0x8] sm:$0xff pattern:$0x73625140]
      %v315 = vld.sshfl [vmem:[#allocation1 + $0x10] sm:$0xff pattern:$0x73625140]
      %320 = vst [vmem:[#allocation1] ss:$4 sm:$0xff] %v310
      %v321 = vld.sshfl [vmem:[#allocation1] sm:$0xff pattern:$0x73625140]
      %v323 = vunpack.c.l.bf16 %v313
      %v324 = vunpack.c.l.bf16 %v314
      %v325 = vunpack.c.l.bf16 %v315
      %v326 = vunpack.c.l.bf16 %v321
      %v331 = vrot.slane %v323, 4
      %v332 = vrot.slane %v324, 4
      %v333 = vrot.slane %v325, 4
      %v334 = vrot.slane %v326, 4
      %335 = vrot.lane.b32.xlu0 %v331, 127
      %v336 = vpop.permute.xlu0 %335
      %337 = vrot.lane.b32.xlu0 %v332, 127
      %v338 = vpop.permute.xlu0 %337
      %339 = vrot.lane.b32.xlu0 %v333, 127
      %v340 = vpop.permute.xlu0 %339
      %341 = vrot.lane.b32.xlu0 %v334, 127
      %v342 = vpop.permute.xlu0 %341
      %vm343 = vcmask 1039360
      %v344 = vsel %vm343, %v336, %v338
      %v345 = vsel %vm343, %v338, %v340
      %v346 = vsel %vm343, %v340, %v342
      %350 = vrot.lane.b32.xlu0 %v323, 126
      %v351 = vpop.permute.xlu0 %350
      %352 = vrot.lane.b32.xlu0 %v324, 126
      %v353 = vpop.permute.xlu0 %352
      %354 = vrot.lane.b32.xlu0 %v325, 126
      %v355 = vpop.permute.xlu0 %354
      %356 = vrot.lane.b32.xlu0 %v326, 126
      %v357 = vpop.permute.xlu0 %356
      %vm358 = vcmask 1031168
      %v359 = vsel %vm358, %v351, %v353
      %v360 = vsel %vm358, %v353, %v355
      %v361 = vsel %vm358, %v355, %v357
      %365 = vrot.lane.b32.xlu0 %v331, 104
      %v366 = vpop.permute.xlu0 %365
      %367 = vrot.lane.b32.xlu0 %v332, 104
      %v368 = vpop.permute.xlu0 %367
      %369 = vrot.lane.b32.xlu0 %v333, 104
      %v370 = vpop.permute.xlu0 %369
      %371 = vrot.lane.b32.xlu0 %v334, 104
      %v372 = vpop.permute.xlu0 %371
      %vm373 = vcmask 850944
      %v374 = vsel %vm373, %v366, %v368
      %v375 = vsel %vm373, %v368, %v370
      %v376 = vsel %vm373, %v370, %v372
      %380 = vrot.lane.b32.xlu0 %v323, 103
      %v381 = vpop.permute.xlu0 %380
      %382 = vrot.lane.b32.xlu0 %v324, 103
      %v383 = vpop.permute.xlu0 %382
      %384 = vrot.lane.b32.xlu0 %v325, 103
      %v385 = vpop.permute.xlu0 %384
      %386 = vrot.lane.b32.xlu0 %v326, 103
      %v387 = vpop.permute.xlu0 %386
      %vm388 = vcmask 842752
      %v389 = vsel %vm388, %v381, %v383
      %v390 = vsel %vm388, %v383, %v385
      %v391 = vsel %vm388, %v385, %v387
      %395 = vrot.lane.b32.xlu0 %v331, 102
      %v396 = vpop.permute.xlu0 %395
      %397 = vrot.lane.b32.xlu0 %v332, 102
      %v398 = vpop.permute.xlu0 %397
      %399 = vrot.lane.b32.xlu0 %v333, 102
      %v400 = vpop.permute.xlu0 %399
      %401 = vrot.lane.b32.xlu0 %v334, 102
      %v402 = vpop.permute.xlu0 %401
      %vm403 = vcmask 834560
      %v404 = vsel %vm403, %v396, %v398
      %v405 = vsel %vm403, %v398, %v400
      %v406 = vsel %vm403, %v400, %v402
      %410 = vrot.lane.b32.xlu0 %v323, 80
      %v411 = vpop.permute.xlu0 %410
      %412 = vrot.lane.b32.xlu0 %v324, 80
      %v413 = vpop.permute.xlu0 %412
      %414 = vrot.lane.b32.xlu0 %v325, 80
      %v415 = vpop.permute.xlu0 %414
      %416 = vrot.lane.b32.xlu0 %v326, 80
      %v417 = vpop.permute.xlu0 %416
      %vm418 = vcmask 654336
      %v419 = vsel %vm418, %v411, %v413
      %v420 = vsel %vm418, %v413, %v415
      %v421 = vsel %vm418, %v415, %v417
      %425 = vrot.lane.b32.xlu0 %v331, 79
      %v426 = vpop.permute.xlu0 %425
      %427 = vrot.lane.b32.xlu0 %v332, 79
      %v428 = vpop.permute.xlu0 %427
      %429 = vrot.lane.b32.xlu0 %v333, 79
      %v430 = vpop.permute.xlu0 %429
      %431 = vrot.lane.b32.xlu0 %v334, 79
      %v432 = vpop.permute.xlu0 %431
      %vm433 = vcmask 646144
      %v434 = vsel %vm433, %v426, %v428
      %v435 = vsel %vm433, %v428, %v430
      %v436 = vsel %vm433, %v430, %v432
      %440 = vrot.lane.b32.xlu0 %v323, 78
      %v441 = vpop.permute.xlu0 %440
      %442 = vrot.lane.b32.xlu0 %v324, 78
      %v443 = vpop.permute.xlu0 %442
      %444 = vrot.lane.b32.xlu0 %v325, 78
      %v445 = vpop.permute.xlu0 %444
      %446 = vrot.lane.b32.xlu0 %v326, 78
      %v447 = vpop.permute.xlu0 %446
      %vm448 = vcmask 637952
      %v449 = vsel %vm448, %v441, %v443
      %v450 = vsel %vm448, %v443, %v445
      %v451 = vsel %vm448, %v445, %v447
      %vm455 = vcmask 1043456
      %v456 = vsel %vm455, %v323, %v344
      %v457 = vsel %vm455, %v324, %v345
      %v458 = vsel %vm455, %v325, %v346
      %v459 = vsel %vm455, %v359, %v374
      %v460 = vsel %vm455, %v360, %v375
      %v461 = vsel %vm455, %v361, %v376
      %v462 = vsel %vm455, %v389, %v404
      %v463 = vsel %vm455, %v390, %v405
      %v464 = vsel %vm455, %v391, %v406
      %v465 = vsel %vm455, %v419, %v434
      %v466 = vsel %vm455, %v420, %v435
      %v467 = vsel %vm455, %v421, %v436
      %v468 = vpack.c.bf16 %v459, %v456
      %v469 = vpack.c.bf16 %v460, %v457
      %v470 = vpack.c.bf16 %v461, %v458
      %v471 = vpack.c.bf16 %v465, %v462
      %v472 = vpack.c.bf16 %v466, %v463
      %v473 = vpack.c.bf16 %v467, %v464
      %v474 = vpack.c.bf16 %v449, %v449
      %v475 = vpack.c.bf16 %v450, %v450
      %v476 = vpack.c.bf16 %v451, %v451
      %v477 = vld [vmem:[%s2] sm:$0xf]
      %v478 = vld [vmem:[%s3] sm:$0xff]
      %480 = vset.pattern.permute.xlu0 0
      %481 = vperm.xlu0 %480, %v478
      %v482 = vpop.permute.xlu0 %481
      %vm484 = vcmask 293888
      %v486 = vsel %vm484, %v477, 0
      %vm488 = vcmask 1041408
      %v490 = vsel %vm488, %v474, 0
      %v493 = vsel %vm488, %v475, 0
      %v496 = vsel %vm488, %v476, 0
      %498 = vmatpush.bf16.msra.mxu0 0
      %499 = vmatpush.bf16.msra.mxu0 0
      %500 = vmatpush.bf16.msra.mxu0 0
      %501 = vmatpush.bf16.msra.mxu0 0
      %502 = vmatpush.bf16.msra.mxu0 0
      %503 = vmatpush.bf16.msra.mxu0 %v490
      %504 = vmatpush.bf16.msra.mxu0 %v471
      %505 = vmatpush.bf16.msra.mxu0 %v468
      %506 = vmatmul.bf16.gmra.mxu0 %v486
      %v507 = vpop.f32.mrf.mxu0
      %v508 = vadd.f32 %v482, %v507
      %v509 = vpop.f32.mrf.mxu0
      %510 = vdwg.mxu0
      %511 = vmatpush.bf16.msra.mxu0 0
      %512 = vmatpush.bf16.msra.mxu0 0
      %513 = vmatpush.bf16.msra.mxu0 0
      %514 = vmatpush.bf16.msra.mxu0 0
      %515 = vmatpush.bf16.msra.mxu0 0
      %516 = vmatpush.bf16.msra.mxu0 %v493
      %517 = vmatpush.bf16.msra.mxu0 %v472
      %518 = vmatpush.bf16.msra.mxu0 %v469
      %519 = vmatmul.bf16.gmra.mxu0 %v486
      %v520 = vpop.f32.mrf.mxu0
      %v521 = vadd.f32 %v482, %v520
      %v522 = vpop.f32.mrf.mxu0
      %523 = vdwg.mxu0
      %524 = vmatpush.bf16.msra.mxu0 0
      %525 = vmatpush.bf16.msra.mxu0 0
      %526 = vmatpush.bf16.msra.mxu0 0
      %527 = vmatpush.bf16.msra.mxu0 0
      %528 = vmatpush.bf16.msra.mxu0 0
      %529 = vmatpush.bf16.msra.mxu0 %v496
      %530 = vmatpush.bf16.msra.mxu0 %v473
      %531 = vmatpush.bf16.msra.mxu0 %v470
      %532 = vmatmul.bf16.gmra.mxu0 %v486
      %v533 = vpop.f32.mrf.mxu0
      %v534 = vadd.f32 %v482, %v533
      %v535 = vpop.f32.mrf.mxu0
      %536 = vdwg.mxu0
      %s537 = sld [smem:[#allocation2]]
      %vm538 = vcmp.ge.f32.partialorder %v508, 0.0
      %vm539 = vcmp.ge.f32.partialorder %v521, 0.0
      %vm540 = vcmp.ge.f32.partialorder %v534, 0.0
      %v541 = vstv %s537
      %v542 = vmul.f32 %v541, %v508
      %v543 = vmul.f32 %v541, %v521
      %v544 = vmul.f32 %v541, %v534
      %v545 = vsel %vm538, %v508, %v542
      %v546 = vsel %vm539, %v521, %v543
      %v547 = vsel %vm540, %v534, %v544
      %548 = vst [vmem:[%s306] sm:$0xff] %v545
      %549 = vst [vmem:[%s306 + $0x8] sm:$0xff] %v546
      %550 = vst [vmem:[%s306 + $0x10] sm:$0xff] %v547
      %s551 = smul.u32 3, %s22
      %p552 = scmp.lt.s32.totalorder %s21, 1
      %s553 = scalar_select %p552, %s21, 1
      %p554 = scmp.lt.s32.totalorder %s551, 2
      %s555 = scalar_select %p554, %s551, 2
      %s556 = smul.addr %s553, 3
      %s557 = sadd.s32 %s555, %s556
      %s558 = smul.addr %s557, 8
      %s559 = scalar_lea.vmem %s5, %s558
      // Predicated region
      $region41: #{conv_block_forward.1} parent=39 // pred_check
        %p560 = pneg %p170
      $region42: #{conv_block_forward.1} parent=39 // pred_check_branch
        %562 = sbr.rel (%p560) target = $region44
      $region43: #{conv_block_forward.1} parent=39 // pred_region
        %s563 = smul.u32 3, %s22
      $region44: #{conv_block_forward.1} parent=39 // pred_fallthru
        _
    $region40: #{conv_block_forward.1} parent=5 // pred_fallthru
      _
    %p564 = scmp.le.s32.totalorder 2, %s12
    // Predicated region
    $region45: #{conv_block_forward.1} parent=5 // pred_check
      %p565 = pneg %p564
    $region46: #{conv_block_forward.1} parent=5 // pred_check_branch
      %567 = sbr.rel (%p565) target = $region48
    $region47: #{conv_block_forward.1} parent=5 // pred_region
      %s568 = ssub.s32 %s12, 2
      // Predicated region
      $region49: #{conv_block_forward.1} parent=47 // pred_check
        %p569 = pneg %p176
      $region50: #{conv_block_forward.1} parent=47 // pred_check_branch
        %571 = sbr.rel (%p569) target = $region52
      $region51: #{conv_block_forward.1} parent=47 // pred_region
        %s572 = smul.u32 3, %s24
        %p573 = scmp.lt.s32.totalorder %s23, 1
        %s574 = scalar_select %p573, %s23, 1
        %p575 = scmp.lt.s32.totalorder %s572, 2
        %s576 = scalar_select %p575, %s572, 2
        %s577 = smul.addr %s574, 3
        %s578 = sadd.s32 %s576, %s577
        %s579 = smul.addr %s578, 8
        %s580 = scalar_lea.vmem %s5, %s579
      $region52: #{conv_block_forward.1} parent=47 // pred_fallthru
        _
    $region48: #{conv_block_forward.1} parent=5 // pred_fallthru
      _
  $region6: #{conv_block_forward.1} parent=0 // loop_footer
    %s16 = sadd.s32 1, %s12
  $region7: #{conv_block_forward.1} parent=0 // loop_footer_branch
    %11 = sbr.rel target = $region3
  $region8: #{conv_block_forward.1} parent=0 // loop_exit
    _

</llo_original>
